<compile_context>
chip_gen: v5e
topology: v5e:2x2
jax: 0.10.0
libtpu: 0.0.40
codegen_flags: <defaults>
</compile_context>

<pallas_src>
import jax
import jax.numpy as jnp
from jax import lax
from jax.experimental import pallas as pl
from jax.experimental.pallas import tpu as pltpu


# --------------------------------- helpers -----------------------------------


def _pick_tile(n, cap):
    """Largest row-tile <= cap that divides n and is a multiple of 8, else n."""
    if n <= cap:
        return n
    t = (cap // 8) * 8
    while t >= 8:
        if n % t == 0:
            return t
        t -= 8
    return n


def _heads_per_group(n_heads, head_dim, target_width=256):
    """Heads packed per QKV-projection step so the matmul N dim is ~target_width."""
    best = 1
    for c in range(1, n_heads + 1):
        if n_heads % c == 0 and c * head_dim <= target_width:
            best = c
    return best


def _vmem_cap_bytes():
    """~70% of physical VMEM (generation-aware); conservative 64 MiB fallback."""
    cap = 64 * 1024 * 1024
    try:
        info = pltpu.get_tpu_info()
        cap = int(getattr(info, "vmem_capacity_bytes", cap))
    except Exception:
        pass
    cap = max(cap, 64 * 1024 * 1024)
    return int(0.7 * cap)


def _clamp_vmem(nbytes):
    return int(min(max(int(nbytes), 8 * 1024 * 1024), _vmem_cap_bytes()))


# ----------------------------- Kernel 1: QKV projection ----------------------


def _qkv_proj_kernel(x_ref, wq_ref, wk_ref, wv_ref, q_ref, k_ref, v_ref):
    # One (batch, row-tile, head-group) per grid step.  The full QKV weights
    # are resident in VMEM (constant index_map); only x streams through.
    g = pl.program_id(2)
    n_hb = q_ref.shape[1]          # heads per group (static)
    hd = q_ref.shape[3]            # head dim (static)

    x = x_ref[0]                                                   # (ts, D) bf16
    yq = jnp.dot(x, wq_ref[g],
                 preferred_element_type=jnp.float32).astype(q_ref.dtype)
    yk = jnp.dot(x, wk_ref[g],
                 preferred_element_type=jnp.float32).astype(k_ref.dtype)
    yv = jnp.dot(x, wv_ref[g],
                 preferred_element_type=jnp.float32).astype(v_ref.dtype)

    # Split the (ts, n_hb*hd) group result into per-head slabs (static slices).
    for j in range(n_hb):
        sl = slice(j * hd, (j + 1) * hd)
        q_ref[0, j] = yq[:, sl]
        k_ref[0, j] = yk[:, sl]
        v_ref[0, j] = yv[:, sl]


# --------------- Kernel 2: flash attention + fused output projection ---------


def _flash_proj_kernel(q_ref, k_ref, v_ref, wp_ref, b_ref, o_ref,
                       acc_o, acc_h, m_sc, l_sc):
    h = pl.program_id(2)
    kv = pl.program_id(3)
    nh = pl.num_programs(2)
    nkv = pl.num_programs(3)

    # Zero the lane-dense (tq, D) output accumulator at the start of the
    # (head, kv) reduction for this (batch, q-tile).
    @pl.when(jnp.logical_and(h == 0, kv == 0))
    def _():
        acc_o[...] = jnp.zeros_like(acc_o)

    # Reset online-softmax state at the start of each head's KV sweep.
    @pl.when(kv == 0)
    def _():
        m_sc[...] = jnp.full(m_sc.shape, -jnp.inf, dtype=m_sc.dtype)
        l_sc[...] = jnp.zeros_like(l_sc)
        acc_h[...] = jnp.zeros_like(acc_h)

    qb = q_ref[0, 0]                                        # (tq, hd)  bf16, pre-scaled
    kb = k_ref[0, 0]                                        # (tkv, hd) bf16
    vb = v_ref[0, 0]                                        # (tkv, hd) bf16

    # Logits for this (q-tile, kv-tile): scale already folded into Q weights.
    s = lax.dot_general(qb, kb, (((1,), (1,)), ((), ())),
                        preferred_element_type=jnp.float32)  # (tq, tkv) f32

    # Online softmax update (all f32 on VPU/EUP).
    m_prev = m_sc[...]
    m_new = jnp.maximum(m_prev, jnp.max(s, axis=-1, keepdims=True))
    alpha = jnp.exp(m_prev - m_new)
    p = jnp.exp(s - m_new)
    l_sc[...] = alpha * l_sc[...] + jnp.sum(p, axis=-1, keepdims=True)
    acc_h[...] = alpha * acc_h[...] + jnp.dot(
        p.astype(jnp.bfloat16), vb, preferred_element_type=jnp.float32)
    m_sc[...] = m_new

    # Finished this head: normalize and project through its (hd, D) proj slab
    # (read from the resident proj weight), accumulate into the output acc.
    @pl.when(kv == nkv - 1)
    def _():
        out_h = acc_h[...] * pl.reciprocal(l_sc[...], approx=True)   # (tq, hd) f32
        acc_o[...] += jnp.dot(out_h.astype(jnp.bfloat16), wp_ref[h],
                              preferred_element_type=jnp.float32)

    # Last head, last kv tile: add bias, single lane-dense store of (tq, D).
    @pl.when(jnp.logical_and(h == nh - 1, kv == nkv - 1))
    def _():
        o_ref[0] = (acc_o[...] + b_ref[...]).astype(o_ref.dtype)


# --------------------------------- Wrappers -----------------------------------


def prepare_attention_params(w_qkv, w_proj, b_proj, n_heads, group_width=256):
    """One-time weight re-layout (kept out of the per-forward hot path).

    w_qkv : (3*D, D)  torch nn.Linear(dim, 3*dim, bias=False) weight (out, in).
    w_proj: (D, D)    torch nn.Linear(dim, dim) weight (out, in).
    b_proj: (D,)      proj bias.
    """
    three_d, D = w_qkv.shape
    assert three_d == 3 * D and D % n_heads == 0
    hd = D // n_heads
    scale = hd ** (-0.5)
    n_hb = _heads_per_group(n_heads, hd, group_width)
    n_groups = n_heads // n_hb

    # torch output-feature index f = i3*(H*hd) + h*hd + d  ->  (3, H, hd, D)
    w = w_qkv.reshape(3, n_heads, hd, D).transpose(0, 1, 3, 2)      # (3, H, D, hd)

    def regroup(wi):
        # (H, D, hd) -> (Hg, D, n_hb*hd): head-group slabs, columns j*hd + d.
        return (wi.reshape(n_groups, n_hb, D, hd)
                  .transpose(0, 2, 1, 3)
                  .reshape(n_groups, D, n_hb * hd)
                  .astype(jnp.bfloat16))

    wq = regroup(w[0] * scale)   # attention scale folded into Q weights
    wk = regroup(w[1])
    wv = regroup(w[2])
    # y = out @ w_proj.T ; per-head slab h is rows [h*hd, (h+1)*hd) of w_proj.T
    wp = jnp.transpose(w_proj).reshape(n_heads, hd, D).astype(jnp.bfloat16)
    bp = b_proj.reshape(1, D).astype(jnp.float32)
    return wq, wk, wv, wp, bp


def attention_forward(x, params, n_heads):
    """x: (B, S, D) float32. params from prepare_attention_params."""
    wq, wk, wv, wp, bp = params
    B, S, D = x.shape
    hd = D // n_heads
    n_groups, _, gw = wq.shape
    n_hb = gw // hd
    assert n_groups * n_hb == n_heads

    # Activations in bf16 end-to-end through the kernels (halves x DMA bytes).
    x_bf = x.astype(jnp.bfloat16)

    ts = _pick_tile(S, 512)    # rows per QKV-projection step
    tq = _pick_tile(S, 256)    # query rows per flash step
    tkv = _pick_tile(S, 1024)  # kv rows per flash step

    # ---------------- Kernel 1: QKV projection (resident weights) ----------------
    qkv_in_specs = [
        pl.BlockSpec((1, ts, D), lambda b, si, g: (b, si, 0)),            # x
        pl.BlockSpec((n_groups, D, gw), lambda b, si, g: (0, 0, 0)),      # wq resident
        pl.BlockSpec((n_groups, D, gw), lambda b, si, g: (0, 0, 0)),      # wk resident
        pl.BlockSpec((n_groups, D, gw), lambda b, si, g: (0, 0, 0)),      # wv resident
    ]
    qkv_out_spec = pl.BlockSpec((1, n_hb, ts, hd), lambda b, si, g: (b, g, si, 0))
    qkv_vmem = (2 * ts * D * 2                      # x (double buffered, bf16)
                + 2 * 3 * n_groups * D * gw * 2     # resident weights (2x slack)
                + 2 * 3 * n_hb * ts * hd * 2        # q/k/v output blocks
                + (2 << 20))

    q, k, v = pl.pallas_call(
        _qkv_proj_kernel,
        out_shape=tuple(jax.ShapeDtypeStruct((B, n_heads, S, hd), jnp.bfloat16)
                        for _ in range(3)),
        grid_spec=pltpu.PrefetchScalarGridSpec(
            num_scalar_prefetch=0,
            grid=(B, S // ts, n_groups),
            in_specs=qkv_in_specs,
            out_specs=(qkv_out_spec, qkv_out_spec, qkv_out_spec),
        ),
        compiler_params=pltpu.CompilerParams(
            dimension_semantics=("parallel", "parallel", "parallel"),
            vmem_limit_bytes=_clamp_vmem(qkv_vmem)),
    )(x_bf, wq, wk, wv)

    # ------- Kernel 2: flash attention (online softmax) + out projection -------
    flash_in_specs = [
        pl.BlockSpec((1, 1, tq, hd), lambda b, qi, h, ki: (b, h, qi, 0)),   # q
        pl.BlockSpec((1, 1, tkv, hd), lambda b, qi, h, ki: (b, h, ki, 0)),  # k
        pl.BlockSpec((1, 1, tkv, hd), lambda b, qi, h, ki: (b, h, ki, 0)),  # v
        pl.BlockSpec((n_heads, hd, D), lambda b, qi, h, ki: (0, 0, 0)),     # wp resident
        pl.BlockSpec((1, D), lambda b, qi, h, ki: (0, 0)),                  # bias resident
    ]
    flash_out_spec = pl.BlockSpec((1, tq, D), lambda b, qi, h, ki: (b, qi, 0))
    flash_vmem = (2 * (tq * hd * 2 + 2 * tkv * hd * 2)     # q/k/v blocks (double buf)
                  + 2 * n_heads * hd * D * 2               # resident proj weight
                  + 2 * D * 4                              # bias
                  + 2 * tq * D * 4                         # output block (double buf)
                  + tq * D * 4 + tq * hd * 4 + 2 * tq * 4  # scratch
                  + (2 << 20))

    out = pl.pallas_call(
        _flash_proj_kernel,
        out_shape=jax.ShapeDtypeStruct((B, S, D), x.dtype),
        grid_spec=pltpu.PrefetchScalarGridSpec(
            num_scalar_prefetch=0,
            grid=(B, S // tq, n_heads, S // tkv),
            in_specs=flash_in_specs,
            out_specs=flash_out_spec,
            scratch_shapes=[
                pltpu.VMEM((tq, D), jnp.float32),    # output accumulator (over heads)
                pltpu.VMEM((tq, hd), jnp.float32),   # per-head attn@v accumulator
                pltpu.VMEM((tq, 1), jnp.float32),    # running max
                pltpu.VMEM((tq, 1), jnp.float32),    # running sum
            ],
        ),
        compiler_params=pltpu.CompilerParams(
            dimension_semantics=("parallel", "parallel", "arbitrary", "arbitrary"),
            vmem_limit_bytes=_clamp_vmem(flash_vmem)),
    )(q, k, v, wp, bp)
    return out


# --------------------------------- Reference ----------------------------------


def _reference(x, w_qkv, w_proj, b_proj, n_heads):
    B, S, D = x.shape
    hd = D // n_heads
    scale = hd ** (-0.5)
    qkv = jnp.einsum('bsd,ed->bse', x, w_qkv)                 # (B,S,3D)
    qkv = qkv.reshape(B, S, 3, n_heads, hd).transpose(2, 0, 3, 1, 4)
    q, k, v = qkv[0], qkv[1], qkv[2]                          # (B,H,S,hd)
    attn = jnp.einsum('bhqd,bhkd->bhqk', q, k) * scale
    attn = jax.nn.softmax(attn, axis=-1)
    out = jnp.einsum('bhqk,bhkd->bhqd', attn, v)
    out = out.transpose(0, 2, 1, 3).reshape(B, S, D)
    return jnp.einsum('bsd,ed->bse', out, w_proj) + b_proj


if __name__ == "__main__":
    B, S, D, H = 2, 8, 32, 8

    key = jax.random.PRNGKey(0)
    kx, kq, kp, kb = jax.random.split(key, 4)
    x = jax.random.normal(kx, (B, S, D), dtype=jnp.float32)
    # qkv: nn.Linear(dim, 3*dim, bias=False)  -> weight (3D, D)
    w_qkv = jax.random.normal(kq, (3 * D, D), dtype=jnp.float32) * 0.05
    # proj: nn.Linear(dim, dim)               -> weight (D, D), bias (D,)
    w_proj = jax.random.normal(kp, (D, D), dtype=jnp.float32) * 0.05
    b_proj = jax.random.normal(kb, (D,), dtype=jnp.float32) * 0.05

    # One-time weight re-layout (kept out of the per-forward hot path).
    params = prepare_attention_params(w_qkv, w_proj, b_proj, H)

    out = attention_forward(x, params, H)
    out = jax.block_until_ready(out)

    ref = _reference(x, w_qkv, w_proj, b_proj, H)
    assert out.shape == (B, S, D)
    max_err = jnp.max(jnp.abs(out - ref))
    # bf16 MXU inputs with f32 accumulation -> relaxed tolerance vs fp32 ref.
    assert jnp.allclose(out, ref, atol=2e-2, rtol=2e-2), f"max abs err {max_err}"

    print("KERNEL_OK")
</pallas_src>

<mosaic_0001>
module attributes {stable_mosaic.version = 11 : i64} {
  func.func @_qkv_proj_kernel(%arg0: i32, %arg1: i32, %arg2: i32, %arg3: memref<1x8x32xbf16, #tpu.memory_space<vmem>>, %arg4: memref<1x32x32xbf16, #tpu.memory_space<vmem>>, %arg5: memref<1x32x32xbf16, #tpu.memory_space<vmem>>, %arg6: memref<1x32x32xbf16, #tpu.memory_space<vmem>>, %arg7: memref<1x8x8x4xbf16, #tpu.memory_space<vmem>>, %arg8: memref<1x8x8x4xbf16, #tpu.memory_space<vmem>>, %arg9: memref<1x8x8x4xbf16, #tpu.memory_space<vmem>>) attributes {dimension_semantics = [#tpu.dimension_semantics<parallel>, #tpu.dimension_semantics<parallel>, #tpu.dimension_semantics<parallel>], iteration_bounds = array<i64: 2, 1, 1>, scalar_prefetch = 0 : i64, scratch_operands = 0 : i64, tpu.core_type = #tpu.core_type<tc>, window_params = [{transform_indices = @transform_0, window_bounds = array<i64: 1, 8, 32>}, {pipeline_mode = #tpu.pipeline_mode<synchronous>, transform_indices = @transform_1, window_bounds = array<i64: 1, 32, 32>}, {pipeline_mode = #tpu.pipeline_mode<synchronous>, transform_indices = @transform_2, window_bounds = array<i64: 1, 32, 32>}, {pipeline_mode = #tpu.pipeline_mode<synchronous>, transform_indices = @transform_3, window_bounds = array<i64: 1, 32, 32>}, {transform_indices = @transform_4, window_bounds = array<i64: 1, 8, 8, 4>}, {transform_indices = @transform_5, window_bounds = array<i64: 1, 8, 8, 4>}, {transform_indices = @transform_6, window_bounds = array<i64: 1, 8, 8, 4>}]} {
    %c0 = arith.constant 0 : index
    %c0_0 = arith.constant 0 : index
    %c0_1 = arith.constant 0 : index
    %0 = vector.load %arg3[%c0, %c0_0, %c0_1] : memref<1x8x32xbf16, #tpu.memory_space<vmem>>, vector<1x8x32xbf16>
    %1 = vector.shape_cast %0 : vector<1x8x32xbf16> to vector<8x32xbf16>
    %2 = arith.index_cast %arg2 : i32 to index
    %c0_2 = arith.constant 0 : index
    %c0_3 = arith.constant 0 : index
    %3 = vector.load %arg4[%2, %c0_2, %c0_3] : memref<1x32x32xbf16, #tpu.memory_space<vmem>>, vector<1x32x32xbf16>
    %4 = vector.shape_cast %3 : vector<1x32x32xbf16> to vector<32x32xbf16>
    %cst = arith.constant dense<0.000000e+00> : vector<8x32xf32>
    %5 = tpu.matmul %1, %4, %cst {dimension_numbers = #tpu.dot_dimension_numbers<[1], [0], [0], [1], [0, 0, 1, 1], [], []>} : vector<8x32xbf16>, vector<32x32xbf16>, vector<8x32xf32> -> vector<8x32xf32>
    %6 = arith.truncf %5 : vector<8x32xf32> to vector<8x32xbf16>
    %7 = arith.index_cast %arg2 : i32 to index
    %c0_4 = arith.constant 0 : index
    %c0_5 = arith.constant 0 : index
    %8 = vector.load %arg5[%7, %c0_4, %c0_5] : memref<1x32x32xbf16, #tpu.memory_space<vmem>>, vector<1x32x32xbf16>
    %9 = vector.shape_cast %8 : vector<1x32x32xbf16> to vector<32x32xbf16>
    %cst_6 = arith.constant dense<0.000000e+00> : vector<8x32xf32>
    %10 = tpu.matmul %1, %9, %cst_6 {dimension_numbers = #tpu.dot_dimension_numbers<[1], [0], [0], [1], [0, 0, 1, 1], [], []>} : vector<8x32xbf16>, vector<32x32xbf16>, vector<8x32xf32> -> vector<8x32xf32>
    %11 = arith.truncf %10 : vector<8x32xf32> to vector<8x32xbf16>
    %12 = arith.index_cast %arg2 : i32 to index
    %c0_7 = arith.constant 0 : index
    %c0_8 = arith.constant 0 : index
    %13 = vector.load %arg6[%12, %c0_7, %c0_8] : memref<1x32x32xbf16, #tpu.memory_space<vmem>>, vector<1x32x32xbf16>
    %14 = vector.shape_cast %13 : vector<1x32x32xbf16> to vector<32x32xbf16>
    %cst_9 = arith.constant dense<0.000000e+00> : vector<8x32xf32>
    %15 = tpu.matmul %1, %14, %cst_9 {dimension_numbers = #tpu.dot_dimension_numbers<[1], [0], [0], [1], [0, 0, 1, 1], [], []>} : vector<8x32xbf16>, vector<32x32xbf16>, vector<8x32xf32> -> vector<8x32xf32>
    %16 = arith.truncf %15 : vector<8x32xf32> to vector<8x32xbf16>
    %17 = vector.extract_strided_slice %6 {offsets = [0, 0], sizes = [8, 4], strides = [1, 1]} : vector<8x32xbf16> to vector<8x4xbf16>
    %c0_10 = arith.constant 0 : index
    %c0_11 = arith.constant 0 : index
    %c0_12 = arith.constant 0 : index
    %c0_13 = arith.constant 0 : index
    %18 = vector.load %arg7[%c0_10, %c0_11, %c0_12, %c0_13] : memref<1x8x8x4xbf16, #tpu.memory_space<vmem>>, vector<1x1x8x4xbf16>
    %19 = vector.shape_cast %18 : vector<1x1x8x4xbf16> to vector<8x4xbf16>
    %20 = vector.shape_cast %17 : vector<8x4xbf16> to vector<1x1x8x4xbf16>
    tpu.vector_store %arg7[%c0_10, %c0_11, %c0_12, %c0_13], %20 {strides = array<i32>} : memref<1x8x8x4xbf16, #tpu.memory_space<vmem>>, vector<1x1x8x4xbf16>,
    %21 = vector.extract_strided_slice %11 {offsets = [0, 0], sizes = [8, 4], strides = [1, 1]} : vector<8x32xbf16> to vector<8x4xbf16>
    %c0_14 = arith.constant 0 : index
    %c0_15 = arith.constant 0 : index
    %c0_16 = arith.constant 0 : index
    %c0_17 = arith.constant 0 : index
    %22 = vector.load %arg8[%c0_14, %c0_15, %c0_16, %c0_17] : memref<1x8x8x4xbf16, #tpu.memory_space<vmem>>, vector<1x1x8x4xbf16>
    %23 = vector.shape_cast %22 : vector<1x1x8x4xbf16> to vector<8x4xbf16>
    %24 = vector.shape_cast %21 : vector<8x4xbf16> to vector<1x1x8x4xbf16>
    tpu.vector_store %arg8[%c0_14, %c0_15, %c0_16, %c0_17], %24 {strides = array<i32>} : memref<1x8x8x4xbf16, #tpu.memory_space<vmem>>, vector<1x1x8x4xbf16>,
    %25 = vector.extract_strided_slice %16 {offsets = [0, 0], sizes = [8, 4], strides = [1, 1]} : vector<8x32xbf16> to vector<8x4xbf16>
    %c0_18 = arith.constant 0 : index
    %c0_19 = arith.constant 0 : index
    %c0_20 = arith.constant 0 : index
    %c0_21 = arith.constant 0 : index
    %26 = vector.load %arg9[%c0_18, %c0_19, %c0_20, %c0_21] : memref<1x8x8x4xbf16, #tpu.memory_space<vmem>>, vector<1x1x8x4xbf16>
    %27 = vector.shape_cast %26 : vector<1x1x8x4xbf16> to vector<8x4xbf16>
    %28 = vector.shape_cast %25 : vector<8x4xbf16> to vector<1x1x8x4xbf16>
    tpu.vector_store %arg9[%c0_18, %c0_19, %c0_20, %c0_21], %28 {strides = array<i32>} : memref<1x8x8x4xbf16, #tpu.memory_space<vmem>>, vector<1x1x8x4xbf16>,
    %29 = vector.extract_strided_slice %6 {offsets = [0, 4], sizes = [8, 4], strides = [1, 1]} : vector<8x32xbf16> to vector<8x4xbf16>
    %c0_22 = arith.constant 0 : index
    %c1 = arith.constant 1 : index
    %c0_23 = arith.constant 0 : index
    %c0_24 = arith.constant 0 : index
    %30 = vector.load %arg7[%c0_22, %c1, %c0_23, %c0_24] : memref<1x8x8x4xbf16, #tpu.memory_space<vmem>>, vector<1x1x8x4xbf16>
    %31 = vector.shape_cast %30 : vector<1x1x8x4xbf16> to vector<8x4xbf16>
    %32 = vector.shape_cast %29 : vector<8x4xbf16> to vector<1x1x8x4xbf16>
    tpu.vector_store %arg7[%c0_22, %c1, %c0_23, %c0_24], %32 {strides = array<i32>} : memref<1x8x8x4xbf16, #tpu.memory_space<vmem>>, vector<1x1x8x4xbf16>,
    %33 = vector.extract_strided_slice %11 {offsets = [0, 4], sizes = [8, 4], strides = [1, 1]} : vector<8x32xbf16> to vector<8x4xbf16>
    %c0_25 = arith.constant 0 : index
    %c1_26 = arith.constant 1 : index
    %c0_27 = arith.constant 0 : index
    %c0_28 = arith.constant 0 : index
    %34 = vector.load %arg8[%c0_25, %c1_26, %c0_27, %c0_28] : memref<1x8x8x4xbf16, #tpu.memory_space<vmem>>, vector<1x1x8x4xbf16>
    %35 = vector.shape_cast %34 : vector<1x1x8x4xbf16> to vector<8x4xbf16>
    %36 = vector.shape_cast %33 : vector<8x4xbf16> to vector<1x1x8x4xbf16>
    tpu.vector_store %arg8[%c0_25, %c1_26, %c0_27, %c0_28], %36 {strides = array<i32>} : memref<1x8x8x4xbf16, #tpu.memory_space<vmem>>, vector<1x1x8x4xbf16>,
    %37 = vector.extract_strided_slice %16 {offsets = [0, 4], sizes = [8, 4], strides = [1, 1]} : vector<8x32xbf16> to vector<8x4xbf16>
    %c0_29 = arith.constant 0 : index
    %c1_30 = arith.constant 1 : index
    %c0_31 = arith.constant 0 : index
    %c0_32 = arith.constant 0 : index
    %38 = vector.load %arg9[%c0_29, %c1_30, %c0_31, %c0_32] : memref<1x8x8x4xbf16, #tpu.memory_space<vmem>>, vector<1x1x8x4xbf16>
    %39 = vector.shape_cast %38 : vector<1x1x8x4xbf16> to vector<8x4xbf16>
    %40 = vector.shape_cast %37 : vector<8x4xbf16> to vector<1x1x8x4xbf16>
    tpu.vector_store %arg9[%c0_29, %c1_30, %c0_31, %c0_32], %40 {strides = array<i32>} : memref<1x8x8x4xbf16, #tpu.memory_space<vmem>>, vector<1x1x8x4xbf16>,
    %41 = vector.extract_strided_slice %6 {offsets = [0, 8], sizes = [8, 4], strides = [1, 1]} : vector<8x32xbf16> to vector<8x4xbf16>
    %c0_33 = arith.constant 0 : index
    %c2 = arith.constant 2 : index
    %c0_34 = arith.constant 0 : index
    %c0_35 = arith.constant 0 : index
    %42 = vector.load %arg7[%c0_33, %c2, %c0_34, %c0_35] : memref<1x8x8x4xbf16, #tpu.memory_space<vmem>>, vector<1x1x8x4xbf16>
    %43 = vector.shape_cast %42 : vector<1x1x8x4xbf16> to vector<8x4xbf16>
    %44 = vector.shape_cast %41 : vector<8x4xbf16> to vector<1x1x8x4xbf16>
    tpu.vector_store %arg7[%c0_33, %c2, %c0_34, %c0_35], %44 {strides = array<i32>} : memref<1x8x8x4xbf16, #tpu.memory_space<vmem>>, vector<1x1x8x4xbf16>,
    %45 = vector.extract_strided_slice %11 {offsets = [0, 8], sizes = [8, 4], strides = [1, 1]} : vector<8x32xbf16> to vector<8x4xbf16>
    %c0_36 = arith.constant 0 : index
    %c2_37 = arith.constant 2 : index
    %c0_38 = arith.constant 0 : index
    %c0_39 = arith.constant 0 : index
    %46 = vector.load %arg8[%c0_36, %c2_37, %c0_38, %c0_39] : memref<1x8x8x4xbf16, #tpu.memory_space<vmem>>, vector<1x1x8x4xbf16>
    %47 = vector.shape_cast %46 : vector<1x1x8x4xbf16> to vector<8x4xbf16>
    %48 = vector.shape_cast %45 : vector<8x4xbf16> to vector<1x1x8x4xbf16>
    tpu.vector_store %arg8[%c0_36, %c2_37, %c0_38, %c0_39], %48 {strides = array<i32>} : memref<1x8x8x4xbf16, #tpu.memory_space<vmem>>, vector<1x1x8x4xbf16>,
    %49 = vector.extract_strided_slice %16 {offsets = [0, 8], sizes = [8, 4], strides = [1, 1]} : vector<8x32xbf16> to vector<8x4xbf16>
    %c0_40 = arith.constant 0 : index
    %c2_41 = arith.constant 2 : index
    %c0_42 = arith.constant 0 : index
    %c0_43 = arith.constant 0 : index
    %50 = vector.load %arg9[%c0_40, %c2_41, %c0_42, %c0_43] : memref<1x8x8x4xbf16, #tpu.memory_space<vmem>>, vector<1x1x8x4xbf16>
    %51 = vector.shape_cast %50 : vector<1x1x8x4xbf16> to vector<8x4xbf16>
    %52 = vector.shape_cast %49 : vector<8x4xbf16> to vector<1x1x8x4xbf16>
    tpu.vector_store %arg9[%c0_40, %c2_41, %c0_42, %c0_43], %52 {strides = array<i32>} : memref<1x8x8x4xbf16, #tpu.memory_space<vmem>>, vector<1x1x8x4xbf16>,
    %53 = vector.extract_strided_slice %6 {offsets = [0, 12], sizes = [8, 4], strides = [1, 1]} : vector<8x32xbf16> to vector<8x4xbf16>
    %c0_44 = arith.constant 0 : index
    %c3 = arith.constant 3 : index
    %c0_45 = arith.constant 0 : index
    %c0_46 = arith.constant 0 : index
    %54 = vector.load %arg7[%c0_44, %c3, %c0_45, %c0_46] : memref<1x8x8x4xbf16, #tpu.memory_space<vmem>>, vector<1x1x8x4xbf16>
    %55 = vector.shape_cast %54 : vector<1x1x8x4xbf16> to vector<8x4xbf16>
    %56 = vector.shape_cast %53 : vector<8x4xbf16> to vector<1x1x8x4xbf16>
    tpu.vector_store %arg7[%c0_44, %c3, %c0_45, %c0_46], %56 {strides = array<i32>} : memref<1x8x8x4xbf16, #tpu.memory_space<vmem>>, vector<1x1x8x4xbf16>,
    %57 = vector.extract_strided_slice %11 {offsets = [0, 12], sizes = [8, 4], strides = [1, 1]} : vector<8x32xbf16> to vector<8x4xbf16>
    %c0_47 = arith.constant 0 : index
    %c3_48 = arith.constant 3 : index
    %c0_49 = arith.constant 0 : index
    %c0_50 = arith.constant 0 : index
    %58 = vector.load %arg8[%c0_47, %c3_48, %c0_49, %c0_50] : memref<1x8x8x4xbf16, #tpu.memory_space<vmem>>, vector<1x1x8x4xbf16>
    %59 = vector.shape_cast %58 : vector<1x1x8x4xbf16> to vector<8x4xbf16>
    %60 = vector.shape_cast %57 : vector<8x4xbf16> to vector<1x1x8x4xbf16>
    tpu.vector_store %arg8[%c0_47, %c3_48, %c0_49, %c0_50], %60 {strides = array<i32>} : memref<1x8x8x4xbf16, #tpu.memory_space<vmem>>, vector<1x1x8x4xbf16>,
    %61 = vector.extract_strided_slice %16 {offsets = [0, 12], sizes = [8, 4], strides = [1, 1]} : vector<8x32xbf16> to vector<8x4xbf16>
    %c0_51 = arith.constant 0 : index
    %c3_52 = arith.constant 3 : index
    %c0_53 = arith.constant 0 : index
    %c0_54 = arith.constant 0 : index
    %62 = vector.load %arg9[%c0_51, %c3_52, %c0_53, %c0_54] : memref<1x8x8x4xbf16, #tpu.memory_space<vmem>>, vector<1x1x8x4xbf16>
    %63 = vector.shape_cast %62 : vector<1x1x8x4xbf16> to vector<8x4xbf16>
    %64 = vector.shape_cast %61 : vector<8x4xbf16> to vector<1x1x8x4xbf16>
    tpu.vector_store %arg9[%c0_51, %c3_52, %c0_53, %c0_54], %64 {strides = array<i32>} : memref<1x8x8x4xbf16, #tpu.memory_space<vmem>>, vector<1x1x8x4xbf16>,
    %65 = vector.extract_strided_slice %6 {offsets = [0, 16], sizes = [8, 4], strides = [1, 1]} : vector<8x32xbf16> to vector<8x4xbf16>
    %c0_55 = arith.constant 0 : index
    %c4 = arith.constant 4 : index
    %c0_56 = arith.constant 0 : index
    %c0_57 = arith.constant 0 : index
    %66 = vector.load %arg7[%c0_55, %c4, %c0_56, %c0_57] : memref<1x8x8x4xbf16, #tpu.memory_space<vmem>>, vector<1x1x8x4xbf16>
    %67 = vector.shape_cast %66 : vector<1x1x8x4xbf16> to vector<8x4xbf16>
    %68 = vector.shape_cast %65 : vector<8x4xbf16> to vector<1x1x8x4xbf16>
    tpu.vector_store %arg7[%c0_55, %c4, %c0_56, %c0_57], %68 {strides = array<i32>} : memref<1x8x8x4xbf16, #tpu.memory_space<vmem>>, vector<1x1x8x4xbf16>,
    %69 = vector.extract_strided_slice %11 {offsets = [0, 16], sizes = [8, 4], strides = [1, 1]} : vector<8x32xbf16> to vector<8x4xbf16>
    %c0_58 = arith.constant 0 : index
    %c4_59 = arith.constant 4 : index
    %c0_60 = arith.constant 0 : index
    %c0_61 = arith.constant 0 : index
    %70 = vector.load %arg8[%c0_58, %c4_59, %c0_60, %c0_61] : memref<1x8x8x4xbf16, #tpu.memory_space<vmem>>, vector<1x1x8x4xbf16>
    %71 = vector.shape_cast %70 : vector<1x1x8x4xbf16> to vector<8x4xbf16>
    %72 = vector.shape_cast %69 : vector<8x4xbf16> to vector<1x1x8x4xbf16>
    tpu.vector_store %arg8[%c0_58, %c4_59, %c0_60, %c0_61], %72 {strides = array<i32>} : memref<1x8x8x4xbf16, #tpu.memory_space<vmem>>, vector<1x1x8x4xbf16>,
    %73 = vector.extract_strided_slice %16 {offsets = [0, 16], sizes = [8, 4], strides = [1, 1]} : vector<8x32xbf16> to vector<8x4xbf16>
    %c0_62 = arith.constant 0 : index
    %c4_63 = arith.constant 4 : index
    %c0_64 = arith.constant 0 : index
    %c0_65 = arith.constant 0 : index
    %74 = vector.load %arg9[%c0_62, %c4_63, %c0_64, %c0_65] : memref<1x8x8x4xbf16, #tpu.memory_space<vmem>>, vector<1x1x8x4xbf16>
    %75 = vector.shape_cast %74 : vector<1x1x8x4xbf16> to vector<8x4xbf16>
    %76 = vector.shape_cast %73 : vector<8x4xbf16> to vector<1x1x8x4xbf16>
    tpu.vector_store %arg9[%c0_62, %c4_63, %c0_64, %c0_65], %76 {strides = array<i32>} : memref<1x8x8x4xbf16, #tpu.memory_space<vmem>>, vector<1x1x8x4xbf16>,
    %77 = vector.extract_strided_slice %6 {offsets = [0, 20], sizes = [8, 4], strides = [1, 1]} : vector<8x32xbf16> to vector<8x4xbf16>
    %c0_66 = arith.constant 0 : index
    %c5 = arith.constant 5 : index
    %c0_67 = arith.constant 0 : index
    %c0_68 = arith.constant 0 : index
    %78 = vector.load %arg7[%c0_66, %c5, %c0_67, %c0_68] : memref<1x8x8x4xbf16, #tpu.memory_space<vmem>>, vector<1x1x8x4xbf16>
    %79 = vector.shape_cast %78 : vector<1x1x8x4xbf16> to vector<8x4xbf16>
    %80 = vector.shape_cast %77 : vector<8x4xbf16> to vector<1x1x8x4xbf16>
    tpu.vector_store %arg7[%c0_66, %c5, %c0_67, %c0_68], %80 {strides = array<i32>} : memref<1x8x8x4xbf16, #tpu.memory_space<vmem>>, vector<1x1x8x4xbf16>,
    %81 = vector.extract_strided_slice %11 {offsets = [0, 20], sizes = [8, 4], strides = [1, 1]} : vector<8x32xbf16> to vector<8x4xbf16>
    %c0_69 = arith.constant 0 : index
    %c5_70 = arith.constant 5 : index
    %c0_71 = arith.constant 0 : index
    %c0_72 = arith.constant 0 : index
    %82 = vector.load %arg8[%c0_69, %c5_70, %c0_71, %c0_72] : memref<1x8x8x4xbf16, #tpu.memory_space<vmem>>, vector<1x1x8x4xbf16>
    %83 = vector.shape_cast %82 : vector<1x1x8x4xbf16> to vector<8x4xbf16>
    %84 = vector.shape_cast %81 : vector<8x4xbf16> to vector<1x1x8x4xbf16>
    tpu.vector_store %arg8[%c0_69, %c5_70, %c0_71, %c0_72], %84 {strides = array<i32>} : memref<1x8x8x4xbf16, #tpu.memory_space<vmem>>, vector<1x1x8x4xbf16>,
    %85 = vector.extract_strided_slice %16 {offsets = [0, 20], sizes = [8, 4], strides = [1, 1]} : vector<8x32xbf16> to vector<8x4xbf16>
    %c0_73 = arith.constant 0 : index
    %c5_74 = arith.constant 5 : index
    %c0_75 = arith.constant 0 : index
    %c0_76 = arith.constant 0 : index
    %86 = vector.load %arg9[%c0_73, %c5_74, %c0_75, %c0_76] : memref<1x8x8x4xbf16, #tpu.memory_space<vmem>>, vector<1x1x8x4xbf16>
    %87 = vector.shape_cast %86 : vector<1x1x8x4xbf16> to vector<8x4xbf16>
    %88 = vector.shape_cast %85 : vector<8x4xbf16> to vector<1x1x8x4xbf16>
    tpu.vector_store %arg9[%c0_73, %c5_74, %c0_75, %c0_76], %88 {strides = array<i32>} : memref<1x8x8x4xbf16, #tpu.memory_space<vmem>>, vector<1x1x8x4xbf16>,
    %89 = vector.extract_strided_slice %6 {offsets = [0, 24], sizes = [8, 4], strides = [1, 1]} : vector<8x32xbf16> to vector<8x4xbf16>
    %c0_77 = arith.constant 0 : index
    %c6 = arith.constant 6 : index
    %c0_78 = arith.constant 0 : index
    %c0_79 = arith.constant 0 : index
    %90 = vector.load %arg7[%c0_77, %c6, %c0_78, %c0_79] : memref<1x8x8x4xbf16, #tpu.memory_space<vmem>>, vector<1x1x8x4xbf16>
    %91 = vector.shape_cast %90 : vector<1x1x8x4xbf16> to vector<8x4xbf16>
    %92 = vector.shape_cast %89 : vector<8x4xbf16> to vector<1x1x8x4xbf16>
    tpu.vector_store %arg7[%c0_77, %c6, %c0_78, %c0_79], %92 {strides = array<i32>} : memref<1x8x8x4xbf16, #tpu.memory_space<vmem>>, vector<1x1x8x4xbf16>,
    %93 = vector.extract_strided_slice %11 {offsets = [0, 24], sizes = [8, 4], strides = [1, 1]} : vector<8x32xbf16> to vector<8x4xbf16>
    %c0_80 = arith.constant 0 : index
    %c6_81 = arith.constant 6 : index
    %c0_82 = arith.constant 0 : index
    %c0_83 = arith.constant 0 : index
    %94 = vector.load %arg8[%c0_80, %c6_81, %c0_82, %c0_83] : memref<1x8x8x4xbf16, #tpu.memory_space<vmem>>, vector<1x1x8x4xbf16>
    %95 = vector.shape_cast %94 : vector<1x1x8x4xbf16> to vector<8x4xbf16>
    %96 = vector.shape_cast %93 : vector<8x4xbf16> to vector<1x1x8x4xbf16>
    tpu.vector_store %arg8[%c0_80, %c6_81, %c0_82, %c0_83], %96 {strides = array<i32>} : memref<1x8x8x4xbf16, #tpu.memory_space<vmem>>, vector<1x1x8x4xbf16>,
    %97 = vector.extract_strided_slice %16 {offsets = [0, 24], sizes = [8, 4], strides = [1, 1]} : vector<8x32xbf16> to vector<8x4xbf16>
    %c0_84 = arith.constant 0 : index
    %c6_85 = arith.constant 6 : index
    %c0_86 = arith.constant 0 : index
    %c0_87 = arith.constant 0 : index
    %98 = vector.load %arg9[%c0_84, %c6_85, %c0_86, %c0_87] : memref<1x8x8x4xbf16, #tpu.memory_space<vmem>>, vector<1x1x8x4xbf16>
    %99 = vector.shape_cast %98 : vector<1x1x8x4xbf16> to vector<8x4xbf16>
    %100 = vector.shape_cast %97 : vector<8x4xbf16> to vector<1x1x8x4xbf16>
    tpu.vector_store %arg9[%c0_84, %c6_85, %c0_86, %c0_87], %100 {strides = array<i32>} : memref<1x8x8x4xbf16, #tpu.memory_space<vmem>>, vector<1x1x8x4xbf16>,
    %101 = vector.extract_strided_slice %6 {offsets = [0, 28], sizes = [8, 4], strides = [1, 1]} : vector<8x32xbf16> to vector<8x4xbf16>
    %c0_88 = arith.constant 0 : index
    %c7 = arith.constant 7 : index
    %c0_89 = arith.constant 0 : index
    %c0_90 = arith.constant 0 : index
    %102 = vector.load %arg7[%c0_88, %c7, %c0_89, %c0_90] : memref<1x8x8x4xbf16, #tpu.memory_space<vmem>>, vector<1x1x8x4xbf16>
    %103 = vector.shape_cast %102 : vector<1x1x8x4xbf16> to vector<8x4xbf16>
    %104 = vector.shape_cast %101 : vector<8x4xbf16> to vector<1x1x8x4xbf16>
    tpu.vector_store %arg7[%c0_88, %c7, %c0_89, %c0_90], %104 {strides = array<i32>} : memref<1x8x8x4xbf16, #tpu.memory_space<vmem>>, vector<1x1x8x4xbf16>,
    %105 = vector.extract_strided_slice %11 {offsets = [0, 28], sizes = [8, 4], strides = [1, 1]} : vector<8x32xbf16> to vector<8x4xbf16>
    %c0_91 = arith.constant 0 : index
    %c7_92 = arith.constant 7 : index
    %c0_93 = arith.constant 0 : index
    %c0_94 = arith.constant 0 : index
    %106 = vector.load %arg8[%c0_91, %c7_92, %c0_93, %c0_94] : memref<1x8x8x4xbf16, #tpu.memory_space<vmem>>, vector<1x1x8x4xbf16>
    %107 = vector.shape_cast %106 : vector<1x1x8x4xbf16> to vector<8x4xbf16>
    %108 = vector.shape_cast %105 : vector<8x4xbf16> to vector<1x1x8x4xbf16>
    tpu.vector_store %arg8[%c0_91, %c7_92, %c0_93, %c0_94], %108 {strides = array<i32>} : memref<1x8x8x4xbf16, #tpu.memory_space<vmem>>, vector<1x1x8x4xbf16>,
    %109 = vector.extract_strided_slice %16 {offsets = [0, 28], sizes = [8, 4], strides = [1, 1]} : vector<8x32xbf16> to vector<8x4xbf16>
    %c0_95 = arith.constant 0 : index
    %c7_96 = arith.constant 7 : index
    %c0_97 = arith.constant 0 : index
    %c0_98 = arith.constant 0 : index
    %110 = vector.load %arg9[%c0_95, %c7_96, %c0_97, %c0_98] : memref<1x8x8x4xbf16, #tpu.memory_space<vmem>>, vector<1x1x8x4xbf16>
    %111 = vector.shape_cast %110 : vector<1x1x8x4xbf16> to vector<8x4xbf16>
    %112 = vector.shape_cast %109 : vector<8x4xbf16> to vector<1x1x8x4xbf16>
    tpu.vector_store %arg9[%c0_95, %c7_96, %c0_97, %c0_98], %112 {strides = array<i32>} : memref<1x8x8x4xbf16, #tpu.memory_space<vmem>>, vector<1x1x8x4xbf16>,
    return
  }
  func.func @transform_0(%arg0: i32, %arg1: i32, %arg2: i32) -> (i32, i32, i32) {
    %c0_i32 = arith.constant 0 : i32
    %c0_i32_0 = arith.constant 0 : i32
    return %arg0, %arg1, %c0_i32 : i32, i32, i32
  }
  func.func @transform_1(%arg0: i32, %arg1: i32, %arg2: i32) -> (i32, i32, i32) {
    %c0_i32 = arith.constant 0 : i32
    %c0_i32_0 = arith.constant 0 : i32
    %c0_i32_1 = arith.constant 0 : i32
    %c0_i32_2 = arith.constant 0 : i32
    return %c0_i32, %c0_i32_0, %c0_i32_1 : i32, i32, i32
  }
  func.func @transform_2(%arg0: i32, %arg1: i32, %arg2: i32) -> (i32, i32, i32) {
    %c0_i32 = arith.constant 0 : i32
    %c0_i32_0 = arith.constant 0 : i32
    %c0_i32_1 = arith.constant 0 : i32
    %c0_i32_2 = arith.constant 0 : i32
    return %c0_i32, %c0_i32_0, %c0_i32_1 : i32, i32, i32
  }
  func.func @transform_3(%arg0: i32, %arg1: i32, %arg2: i32) -> (i32, i32, i32) {
    %c0_i32 = arith.constant 0 : i32
    %c0_i32_0 = arith.constant 0 : i32
    %c0_i32_1 = arith.constant 0 : i32
    %c0_i32_2 = arith.constant 0 : i32
    return %c0_i32, %c0_i32_0, %c0_i32_1 : i32, i32, i32
  }
  func.func @transform_4(%arg0: i32, %arg1: i32, %arg2: i32) -> (i32, i32, i32, i32) {
    %c0_i32 = arith.constant 0 : i32
    %c0_i32_0 = arith.constant 0 : i32
    return %arg0, %arg2, %arg1, %c0_i32 : i32, i32, i32, i32
  }
  func.func @transform_5(%arg0: i32, %arg1: i32, %arg2: i32) -> (i32, i32, i32, i32) {
    %c0_i32 = arith.constant 0 : i32
    %c0_i32_0 = arith.constant 0 : i32
    return %arg0, %arg2, %arg1, %c0_i32 : i32, i32, i32, i32
  }
  func.func @transform_6(%arg0: i32, %arg1: i32, %arg2: i32) -> (i32, i32, i32, i32) {
    %c0_i32 = arith.constant 0 : i32
    %c0_i32_0 = arith.constant 0 : i32
    return %arg0, %arg2, %arg1, %c0_i32 : i32, i32, i32, i32
  }
}

</mosaic_0001>

<llo_original>
// kernel: tpu_custom_call.1
$region0: #{tpu_custom_call.1}
  #allocation0 [shape = 'u32[]', space=smem, size = 0x4, offset = 0x4, fixed_abs, tag = 'smem constant byte address 0x4 - core index']
  #allocation1 [shape = 'u32[72,128]{1,0:T(1,128)}', space=vmem, size = 0x9000, scoped, tag = 'internal scratch']
  %s0 = inlined_call_operand.hbm [shape: bf16[2,8,32], index: 0, kind: input, shape index: {}]
  %s1 = inlined_call_operand.hbm [shape: bf16[1,32,32], index: 1, kind: input, shape index: {}]
  %s2 = inlined_call_operand.hbm [shape: bf16[1,32,32], index: 2, kind: input, shape index: {}]
  %s3 = inlined_call_operand.hbm [shape: bf16[1,32,32], index: 3, kind: input, shape index: {}]
  %s4 = inlined_call_operand.vmem [shape: bf16[2,8,8,4], index: 4, kind: output, shape index: {0}]
  %s5 = inlined_call_operand.vmem [shape: bf16[2,8,8,4], index: 5, kind: output, shape index: {1}]
  %s6 = inlined_call_operand.vmem [shape: bf16[2,8,8,4], index: 6, kind: output, shape index: {2}]
  %7 = xla_tuple %s4, %s5, %s6
  %s8 = sld [smem:[#allocation0]]
  $region81: #{tpu_custom_call.1} parent=0
    _
  %s10 = ssub.s32 1, %s8
  %s11 = scalar_select 0, %s10, %s8
  $region1: #{tpu_custom_call.1} parent=0
    #allocation2 [shape = 'u8[4096]{0}', space=vmem, size = 0x1000, scoped, tag = 'input window, operand 0']
    #allocation3 [shape = 's32[2]{0}', space=sflag, size = 0x8, scoped, tag = 'scoped memory for tpu_custom_call.1']
    #allocation4 [shape = 'u8[8192]{0}', space=vmem, size = 0x2000, scoped, tag = 'input window, operand 1, single buffered']
    #allocation5 [shape = 's32[1]{0}', space=sflag, size = 0x4, scoped, tag = 'scoped memory for tpu_custom_call.1']
    #allocation6 [shape = 'u8[8192]{0}', space=vmem, size = 0x2000, scoped, tag = 'input window, operand 2, single buffered']
    #allocation7 [shape = 'u8[8192]{0}', space=vmem, size = 0x2000, scoped, tag = 'input window, operand 3, single buffered']
    #allocation8 [shape = 's32[1]{0}', space=sflag, size = 0x4, scoped, tag = 'scoped memory for tpu_custom_call.1']
    %12 = vsyncpa [#allocation3], 0
    %s13 = scalar_lea.sflag [#allocation3], 1
    %14 = vsyncpa %s13, 0
    %15 = vsyncpa [#allocation5], 0
    %16 = vsyncpa [#allocation8], 0
    loop: start=0, step=1, limit=4
    $region2: #{tpu_custom_call.1} parent=1 // loop_pre_header
      _
    $region3: #{tpu_custom_call.1} parent=1 // loop_header
      %s18 = sphi 0, %s22
      %p19 = scmp.ge.s32.totalorder %s18, 4
      %s25 = sphi 0, %s44
      %s26 = sphi 0, %s40
      %s27 = sphi 0, %s36
      %s28 = sphi 0, %s25
      %s29 = sphi 0, %s26
      %s30 = sphi 0, %s27
      %s31 = sphi 0, %s28
      %s32 = sphi 0, %s29
      %s33 = sphi 0, %s30
      %s49 = sphi 0, %s51
      %s52 = sphi 0, %s49
      %s53 = sphi 0, %s52
      %s69 = sphi 0, %s53
      %s73 = sphi 0, %s73
      %s75 = sphi 0, %s73
      %s76 = sphi 0, %s75
      %s90 = sphi 0, %s76
      %s94 = sphi 0, %s94
      %s96 = sphi 0, %s94
      %s97 = sphi 0, %s96
      %s111 = sphi 0, %s97
      %s115 = sphi 0, %s115
      %s117 = sphi 0, %s115
      %s118 = sphi 0, %s117
      %s132 = sphi 0, %s118
      %s142 = sphi 0, %s144
      %s145 = sphi 0, %s142
      %s146 = sphi 0, %s145
      %s162 = sphi 0, %s146
      %s172 = sphi 0, %s174
      %s175 = sphi 0, %s172
      %s176 = sphi 0, %s175
      %s192 = sphi 0, %s176
      %s202 = sphi 0, %s204
      %s205 = sphi 0, %s202
      %s206 = sphi 0, %s205
      %s222 = sphi 0, %s206
    $region4: #{tpu_custom_call.1} parent=1 // loop_header_branch
      %21 = sbr.rel (%p19) target = $region8
    $region5: #{tpu_custom_call.1} parent=1 // loop_body
      %s23 = ssub.s32 %s18, 1
      %s24 = ssub.s32 %s18, 2
      %s34 = sadd.s32 1, %s27
      %p35 = scmp.ge.s32.totalorder %s34, 1
      %s36 = scalar_select %p35, 0, %s34
      %s37 = sadd.s32 1, %s26
      %s38 = scalar_select %p35, %s37, %s26
      %p39 = scmp.ge.s32.totalorder %s38, 1
      %s40 = scalar_select %p39, 0, %s38
      %s41 = sadd.s32 1, %s25
      %s42 = scalar_select %p39, %s41, %s25
      %p43 = scmp.ge.s32.totalorder %s42, 2
      %s44 = scalar_select %p43, 0, %s42
      %s45 = ssub.s32 %s25, %s44
      %s46 = ssub.s32 %s26, %s40
      %s47 = sor.u32 %s45, %s46
      %p48 = scmp.eq.s32.totalorder %s47, 0
      %s50 = sadd.s32 %s49, 1
      %s51 = scalar_select %p48, %s49, %s50
      %p54 = pneg %p48
      %p55 = scmp.eq.s32.totalorder %s18, 1
      %p56 = por %p54, %p55
      %p57 = scmp.ne.s32.totalorder %s49, %s52
      %p58 = scmp.eq.s32.totalorder %s18, 0
      %p59 = por %p57, %p58
      %p60 = scmp.ne.s32.totalorder %s49, %s52
      %p61 = scmp.eq.s32.totalorder %s23, 1
      %p62 = por %p60, %p61
      %p63 = scmp.ne.s32.totalorder %s52, %s53
      %p64 = scmp.eq.s32.totalorder %s23, 0
      %p65 = por %p63, %p64
      %p66 = scmp.ne.s32.totalorder %s52, %s53
      %p67 = scmp.eq.s32.totalorder %s24, 1
      %p68 = por %p66, %p67
      %p70 = scmp.ne.s32.totalorder %s53, %s69
      %p71 = scmp.eq.s32.totalorder %s24, 0
      %p72 = por %p70, %p71
      %s74 = sadd.s32 %s73, 1
      %p77 = scmp.eq.s32.totalorder %s18, 1
      %p78 = scmp.ne.s32.totalorder %s73, %s75
      %p79 = scmp.eq.s32.totalorder %s18, 0
      %p80 = por %p78, %p79
      %p81 = scmp.ne.s32.totalorder %s73, %s75
      %p82 = scmp.eq.s32.totalorder %s23, 1
      %p83 = por %p81, %p82
      %p84 = scmp.ne.s32.totalorder %s75, %s76
      %p85 = scmp.eq.s32.totalorder %s23, 0
      %p86 = por %p84, %p85
      %p87 = scmp.ne.s32.totalorder %s75, %s76
      %p88 = scmp.eq.s32.totalorder %s24, 1
      %p89 = por %p87, %p88
      %p91 = scmp.ne.s32.totalorder %s76, %s90
      %p92 = scmp.eq.s32.totalorder %s24, 0
      %p93 = por %p91, %p92
      %s95 = sadd.s32 %s94, 1
      %p98 = scmp.eq.s32.totalorder %s18, 1
      %p99 = scmp.ne.s32.totalorder %s94, %s96
      %p100 = scmp.eq.s32.totalorder %s18, 0
      %p101 = por %p99, %p100
      %p102 = scmp.ne.s32.totalorder %s94, %s96
      %p103 = scmp.eq.s32.totalorder %s23, 1
      %p104 = por %p102, %p103
      %p105 = scmp.ne.s32.totalorder %s96, %s97
      %p106 = scmp.eq.s32.totalorder %s23, 0
      %p107 = por %p105, %p106
      %p108 = scmp.ne.s32.totalorder %s96, %s97
      %p109 = scmp.eq.s32.totalorder %s24, 1
      %p110 = por %p108, %p109
      %p112 = scmp.ne.s32.totalorder %s97, %s111
      %p113 = scmp.eq.s32.totalorder %s24, 0
      %p114 = por %p112, %p113
      %s116 = sadd.s32 %s115, 1
      %p119 = scmp.eq.s32.totalorder %s18, 1
      %p120 = scmp.ne.s32.totalorder %s115, %s117
      %p121 = scmp.eq.s32.totalorder %s18, 0
      %p122 = por %p120, %p121
      %p123 = scmp.ne.s32.totalorder %s115, %s117
      %p124 = scmp.eq.s32.totalorder %s23, 1
      %p125 = por %p123, %p124
      %p126 = scmp.ne.s32.totalorder %s117, %s118
      %p127 = scmp.eq.s32.totalorder %s23, 0
      %p128 = por %p126, %p127
      %p129 = scmp.ne.s32.totalorder %s117, %s118
      %p130 = scmp.eq.s32.totalorder %s24, 1
      %p131 = por %p129, %p130
      %p133 = scmp.ne.s32.totalorder %s118, %s132
      %p134 = scmp.eq.s32.totalorder %s24, 0
      %p135 = por %p133, %p134
      %s136 = ssub.s32 %s25, %s44
      %s137 = ssub.s32 %s27, %s36
      %s138 = sor.u32 %s136, %s137
      %s139 = ssub.s32 %s26, %s40
      %s140 = sor.u32 %s138, %s139
      %p141 = scmp.eq.s32.totalorder %s140, 0
      %s143 = sadd.s32 %s142, 1
      %s144 = scalar_select %p141, %s142, %s143
      %p147 = pneg %p141
      %p148 = scmp.eq.s32.totalorder %s18, 1
      %p149 = por %p147, %p148
      %p150 = scmp.ne.s32.totalorder %s142, %s145
      %p151 = scmp.eq.s32.totalorder %s18, 0
      %p152 = por %p150, %p151
      %p153 = scmp.ne.s32.totalorder %s142, %s145
      %p154 = scmp.eq.s32.totalorder %s23, 1
      %p155 = por %p153, %p154
      %p156 = scmp.ne.s32.totalorder %s145, %s146
      %p157 = scmp.eq.s32.totalorder %s23, 0
      %p158 = por %p156, %p157
      %p159 = scmp.ne.s32.totalorder %s145, %s146
      %p160 = scmp.eq.s32.totalorder %s24, 1
      %p161 = por %p159, %p160
      %p163 = scmp.ne.s32.totalorder %s146, %s162
      %p164 = scmp.eq.s32.totalorder %s24, 0
      %p165 = por %p163, %p164
      %s166 = ssub.s32 %s25, %s44
      %s167 = ssub.s32 %s27, %s36
      %s168 = sor.u32 %s166, %s167
      %s169 = ssub.s32 %s26, %s40
      %s170 = sor.u32 %s168, %s169
      %p171 = scmp.eq.s32.totalorder %s170, 0
      %s173 = sadd.s32 %s172, 1
      %s174 = scalar_select %p171, %s172, %s173
      %p177 = pneg %p171
      %p178 = scmp.eq.s32.totalorder %s18, 1
      %p179 = por %p177, %p178
      %p180 = scmp.ne.s32.totalorder %s172, %s175
      %p181 = scmp.eq.s32.totalorder %s18, 0
      %p182 = por %p180, %p181
      %p183 = scmp.ne.s32.totalorder %s172, %s175
      %p184 = scmp.eq.s32.totalorder %s23, 1
      %p185 = por %p183, %p184
      %p186 = scmp.ne.s32.totalorder %s175, %s176
      %p187 = scmp.eq.s32.totalorder %s23, 0
      %p188 = por %p186, %p187
      %p189 = scmp.ne.s32.totalorder %s175, %s176
      %p190 = scmp.eq.s32.totalorder %s24, 1
      %p191 = por %p189, %p190
      %p193 = scmp.ne.s32.totalorder %s176, %s192
      %p194 = scmp.eq.s32.totalorder %s24, 0
      %p195 = por %p193, %p194
      %s196 = ssub.s32 %s25, %s44
      %s197 = ssub.s32 %s27, %s36
      %s198 = sor.u32 %s196, %s197
      %s199 = ssub.s32 %s26, %s40
      %s200 = sor.u32 %s198, %s199
      %p201 = scmp.eq.s32.totalorder %s200, 0
      %s203 = sadd.s32 %s202, 1
      %s204 = scalar_select %p201, %s202, %s203
      %p207 = pneg %p201
      %p208 = scmp.eq.s32.totalorder %s18, 1
      %p209 = por %p207, %p208
      %p210 = scmp.ne.s32.totalorder %s202, %s205
      %p211 = scmp.eq.s32.totalorder %s18, 0
      %p212 = por %p210, %p211
      %p213 = scmp.ne.s32.totalorder %s202, %s205
      %p214 = scmp.eq.s32.totalorder %s23, 1
      %p215 = por %p213, %p214
      %p216 = scmp.ne.s32.totalorder %s205, %s206
      %p217 = scmp.eq.s32.totalorder %s23, 0
      %p218 = por %p216, %p217
      %p219 = scmp.ne.s32.totalorder %s205, %s206
      %p220 = scmp.eq.s32.totalorder %s24, 1
      %p221 = por %p219, %p220
      %p223 = scmp.ne.s32.totalorder %s206, %s222
      %p224 = scmp.eq.s32.totalorder %s24, 0
      %p225 = por %p223, %p224
      %p226 = scmp.le.s32.totalorder 1, %s18
      %p227 = scmp.lt.s32.totalorder %s18, 3
      %p228 = pnand %p226, %p227
      %p229 = pneg %p228
      // Predicated region
      $region9: #{tpu_custom_call.1} parent=5 // pred_check
        _
      $region10: #{tpu_custom_call.1} parent=5 // pred_check_branch
        %231 = sbr.rel (%p228) target = $region12
      $region11: #{tpu_custom_call.1} parent=5 // pred_region
        %s232 = ssub.s32 %s18, 1
        // Predicated region
        $region13: #{tpu_custom_call.1} parent=11 // pred_check
          %p233 = pneg %p86
        $region14: #{tpu_custom_call.1} parent=11 // pred_check_branch
          %235 = sbr.rel (%p233) target = $region16
        $region15: #{tpu_custom_call.1} parent=11 // pred_region
          %237 = vsyncadd [#allocation5], 0
          %s238 = sshll.u32 %s1, 4
          %s239 = int_to_ptr.hbm [resolvable:$true] %s238
          %s240 = sshll.u32 [#allocation4], 4
          %s241 = int_to_ptr.vmem [resolvable:$true] %s240
          %246 = dma.hbm_to_vmem [thread:$0]  %s239, 256, %s241, [#allocation5], 64, 64, 4
        $region16: #{tpu_custom_call.1} parent=11 // pred_fallthru
          _
        // Predicated region
        $region17: #{tpu_custom_call.1} parent=11 // pred_check
          %p247 = pneg %p107
        $region18: #{tpu_custom_call.1} parent=11 // pred_check_branch
          %249 = sbr.rel (%p247) target = $region20
        $region19: #{tpu_custom_call.1} parent=11 // pred_region
          %251 = vsyncadd [#allocation5], 0
          %s252 = sshll.u32 %s2, 4
          %s253 = int_to_ptr.hbm [resolvable:$true] %s252
          %s254 = sshll.u32 [#allocation6], 4
          %s255 = int_to_ptr.vmem [resolvable:$true] %s254
          %260 = dma.hbm_to_vmem [thread:$0]  %s253, 256, %s255, [#allocation5], 64, 64, 4
        $region20: #{tpu_custom_call.1} parent=11 // pred_fallthru
          _
        // Predicated region
        $region21: #{tpu_custom_call.1} parent=11 // pred_check
          %p261 = pneg %p128
        $region22: #{tpu_custom_call.1} parent=11 // pred_check_branch
          %263 = sbr.rel (%p261) target = $region24
        $region23: #{tpu_custom_call.1} parent=11 // pred_region
          %265 = vsyncadd [#allocation8], 0
          %s266 = sshll.u32 %s3, 4
          %s267 = int_to_ptr.hbm [resolvable:$true] %s266
          %s268 = sshll.u32 [#allocation7], 4
          %s269 = int_to_ptr.vmem [resolvable:$true] %s268
          %274 = dma.hbm_to_vmem [thread:$0]  %s267, 256, %s269, [#allocation8], 64, 64, 4
        $region24: #{tpu_custom_call.1} parent=11 // pred_fallthru
          _
      $region12: #{tpu_custom_call.1} parent=5 // pred_fallthru
        _
      %p275 = scmp.lt.s32.totalorder %s18, 2
      // Predicated region
      $region25: #{tpu_custom_call.1} parent=5 // pred_check
        %p276 = pneg %p275
      $region26: #{tpu_custom_call.1} parent=5 // pred_check_branch
        %278 = sbr.rel (%p276) target = $region28
      $region27: #{tpu_custom_call.1} parent=5 // pred_region
        // Predicated region
        $region29: #{tpu_custom_call.1} parent=27 // pred_check
          %p279 = pneg %p59
        $region30: #{tpu_custom_call.1} parent=27 // pred_check_branch
          %281 = sbr.rel (%p279) target = $region32
        $region31: #{tpu_custom_call.1} parent=27 // pred_region
          %s282 = sand.u32 %s49, 1
          %s283 = scalar_lea.sflag [#allocation3], %s282
          %s284 = sand.u32 %s49, 1
          %s285 = smul.addr %s284, 4
          %s286 = scalar_lea.vmem [#allocation2], %s285
          %288 = vsyncadd %s283, 0
          %s289 = sadd.s32 %s26, %s25
          %s290 = smul.addr %s289, 4
          %s291 = scalar_lea.hbm %s0, %s290
          %s293 = sshll.u32 %s291, 4
          %s294 = int_to_ptr.hbm [resolvable:$true] %s293
          %s295 = sshll.u32 %s286, 4
          %s296 = int_to_ptr.vmem [resolvable:$true] %s295
          %298 = dma.hbm_to_vmem [thread:$0]  %s294, 64, %s296, %s283
        $region32: #{tpu_custom_call.1} parent=27 // pred_fallthru
          _
      $region28: #{tpu_custom_call.1} parent=5 // pred_fallthru
        _
      %p299 = scmp.le.s32.totalorder 1, %s18
      %p300 = scmp.lt.s32.totalorder %s18, 3
      %p301 = pnand %p299, %p300
      %p302 = pneg %p301
      // Predicated region
      $region33: #{tpu_custom_call.1} parent=5 // pred_check
        _
      $region34: #{tpu_custom_call.1} parent=5 // pred_check_branch
        %304 = sbr.rel (%p301) target = $region36
      $region35: #{tpu_custom_call.1} parent=5 // pred_region
        %s305 = ssub.s32 %s18, 1
        %s306 = sand.u32 %s52, 1
        %s307 = scalar_lea.sflag [#allocation3], %s306
        %s308 = sand.u32 %s52, 1
        %s309 = smul.addr %s308, 4
        %s310 = scalar_lea.vmem [#allocation2], %s309
        // Predicated region
        $region37: #{tpu_custom_call.1} parent=35 // pred_check
          %p311 = pneg %p65
        $region38: #{tpu_custom_call.1} parent=35 // pred_check_branch
          %313 = sbr.rel (%p311) target = $region40
        $region39: #{tpu_custom_call.1} parent=35 // pred_region
          %315 = dma.done %s307, 64
        $region40: #{tpu_custom_call.1} parent=35 // pred_fallthru
          _
        // Predicated region
        $region41: #{tpu_custom_call.1} parent=35 // pred_check
          %p316 = pneg %p86
        $region42: #{tpu_custom_call.1} parent=35 // pred_check_branch
          %318 = sbr.rel (%p316) target = $region44
        $region43: #{tpu_custom_call.1} parent=35 // pred_region
          %320 = dma.done [#allocation5], 256
        $region44: #{tpu_custom_call.1} parent=35 // pred_fallthru
          _
        // Predicated region
        $region45: #{tpu_custom_call.1} parent=35 // pred_check
          %p321 = pneg %p107
        $region46: #{tpu_custom_call.1} parent=35 // pred_check_branch
          %323 = sbr.rel (%p321) target = $region48
        $region47: #{tpu_custom_call.1} parent=35 // pred_region
          %325 = dma.done [#allocation5], 256
        $region48: #{tpu_custom_call.1} parent=35 // pred_fallthru
          _
        // Predicated region
        $region49: #{tpu_custom_call.1} parent=35 // pred_check
          %p326 = pneg %p128
        $region50: #{tpu_custom_call.1} parent=35 // pred_check_branch
          %328 = sbr.rel (%p326) target = $region52
        $region51: #{tpu_custom_call.1} parent=35 // pred_region
          %330 = dma.done [#allocation8], 256
        $region52: #{tpu_custom_call.1} parent=35 // pred_fallthru
          _
        %s331 = sand.u32 %s52, 1
        %s332 = scalar_lea.sflag [#allocation3], %s331
        %s333 = sand.u32 %s52, 1
        %s334 = smul.addr %s333, 4
        %s335 = scalar_lea.vmem [#allocation2], %s334
        %p336 = pneg %p65
        %p337 = pneg %p62
        %p338 = pneg %p86
        %p339 = pneg %p83
        %p340 = pneg %p107
        %p341 = pneg %p104
        %p342 = pneg %p128
        %p343 = pneg %p125
        %p344 = pneg %p158
        %p345 = pneg %p155
        %s346 = smul.u32 8, %s30
        %p347 = scmp.lt.s32.totalorder %s28, 1
        %s348 = scalar_select %p347, %s28, 1
        %p349 = scmp.lt.s32.totalorder %s346, 7
        %s350 = scalar_select %p349, %s346, 7
        %p351 = scmp.lt.s32.totalorder %s29, 0
        %s352 = scalar_select %p351, %s29, 0
        %s353 = sadd.s32 %s352, %s350
        %s354 = smul.addr %s348, 8
        %s355 = sadd.s32 %s353, %s354
        %s356 = smul.addr %s355, 4
        %s357 = scalar_lea.vmem %s4, %s356
        %p358 = pneg %p188
        %p359 = pneg %p185
        %s360 = smul.u32 8, %s30
        %p361 = scmp.lt.s32.totalorder %s28, 1
        %s362 = scalar_select %p361, %s28, 1
        %p363 = scmp.lt.s32.totalorder %s360, 7
        %s364 = scalar_select %p363, %s360, 7
        %p365 = scmp.lt.s32.totalorder %s29, 0
        %s366 = scalar_select %p365, %s29, 0
        %s367 = sadd.s32 %s366, %s364
        %s368 = smul.addr %s362, 8
        %s369 = sadd.s32 %s367, %s368
        %s370 = smul.addr %s369, 4
        %s371 = scalar_lea.vmem %s5, %s370
        %p372 = pneg %p218
        %p373 = pneg %p215
        %s374 = smul.u32 8, %s30
        %p375 = scmp.lt.s32.totalorder %s28, 1
        %s376 = scalar_select %p375, %s28, 1
        %p377 = scmp.lt.s32.totalorder %s374, 7
        %s378 = scalar_select %p377, %s374, 7
        %p379 = scmp.lt.s32.totalorder %s29, 0
        %s380 = scalar_select %p379, %s29, 0
        %s381 = sadd.s32 %s380, %s378
        %s382 = smul.addr %s376, 8
        %s383 = sadd.s32 %s381, %s382
        %s384 = smul.addr %s383, 4
        %s385 = scalar_lea.vmem %s6, %s384
        %s386 = smul.u32 8, %s30
        %p387 = scmp.lt.s32.totalorder %s28, 1
        %s388 = scalar_select %p387, %s28, 1
        %p389 = scmp.lt.s32.totalorder %s386, 7
        %s390 = scalar_select %p389, %s386, 7
        %p391 = scmp.lt.s32.totalorder %s29, 0
        %s392 = scalar_select %p391, %s29, 0
        %s393 = sadd.s32 %s392, %s390
        %s394 = smul.addr %s388, 8
        %s395 = sadd.s32 %s393, %s394
        %s396 = smul.addr %s395, 4
        %s397 = scalar_lea.vmem %s4, %s396
        %s398 = smul.u32 8, %s30
        %s399 = smul.u32 8, %s30
        %p400 = scmp.lt.s32.totalorder %s28, 1
        %s401 = scalar_select %p400, %s28, 1
        %p402 = scmp.lt.s32.totalorder %s399, 7
        %s403 = scalar_select %p402, %s399, 7
        %p404 = scmp.lt.s32.totalorder %s29, 0
        %s405 = scalar_select %p404, %s29, 0
        %s406 = sadd.s32 %s405, %s403
        %s407 = smul.addr %s401, 8
        %s408 = sadd.s32 %s406, %s407
        %s409 = smul.addr %s408, 4
        %s410 = scalar_lea.vmem %s5, %s409
        %s411 = smul.u32 8, %s30
        %s412 = smul.u32 8, %s30
        %p413 = scmp.lt.s32.totalorder %s28, 1
        %s414 = scalar_select %p413, %s28, 1
        %p415 = scmp.lt.s32.totalorder %s412, 7
        %s416 = scalar_select %p415, %s412, 7
        %p417 = scmp.lt.s32.totalorder %s29, 0
        %s418 = scalar_select %p417, %s29, 0
        %s419 = sadd.s32 %s418, %s416
        %s420 = smul.addr %s414, 8
        %s421 = sadd.s32 %s419, %s420
        %s422 = smul.addr %s421, 4
        %s423 = scalar_lea.vmem %s6, %s422
        %s424 = smul.u32 8, %s30
        %v426 = vld [vmem:[%s310] sm:$0xf]
        %s427 = smul.u32 %s30, 4
        %s428 = smul.addr %s427, 4
        %s429 = scalar_lea.vmem [#allocation4], %s428
        %v430 = vld [vmem:[%s429] sm:$0xf]
        %v431 = vld [vmem:[%s429 + $0x4] sm:$0xf]
        %v432 = vld [vmem:[%s429 + $0x8] sm:$0xf]
        %v433 = vld [vmem:[%s429 + $0xc] sm:$0xf]
        %v438 = vunpack.c.l.b16 %v430
        %v439 = vunpack.c.l.b16 %v431
        %v440 = vunpack.c.l.b16 %v432
        %v441 = vunpack.c.l.b16 %v433
        %v442 = vpack.c.b16 %v439, %v438
        %v443 = vpack.c.b16 %v441, %v440
        %vm446 = vcmask 261120
        %v448 = vsel %vm446, %v426, 0
        %450 = vmatpush.bf16.msra.mxu0 0
        %451 = vmatpush.bf16.msra.mxu0 0
        %452 = vmatpush.bf16.msra.mxu0 0
        %453 = vmatpush.bf16.msra.mxu0 0
        %454 = vmatpush.bf16.msra.mxu0 0
        %455 = vmatpush.bf16.msra.mxu0 0
        %456 = vmatpush.bf16.msra.mxu0 %v443
        %457 = vmatpush.bf16.msra.mxu0 %v442
        %458 = vmatmul.bf16.gmra.mxu0 %v448
        %v459 = vpop.f32.mrf.mxu0
        %v460 = vadd.f32 0.0, %v459
        %v461 = vpop.f32.mrf.mxu0
        %462 = vdwg.mxu0
        %v463 = vpack.c.bf16 %v460, %v460
        %s464 = smul.addr %s427, 4
        %s465 = scalar_lea.vmem [#allocation6], %s464
        %v466 = vld [vmem:[%s465] sm:$0xf]
        %v467 = vld [vmem:[%s465 + $0x4] sm:$0xf]
        %v468 = vld [vmem:[%s465 + $0x8] sm:$0xf]
        %v469 = vld [vmem:[%s465 + $0xc] sm:$0xf]
        %v474 = vunpack.c.l.b16 %v466
        %v475 = vunpack.c.l.b16 %v467
        %v476 = vunpack.c.l.b16 %v468
        %v477 = vunpack.c.l.b16 %v469
        %v478 = vpack.c.b16 %v475, %v474
        %v479 = vpack.c.b16 %v477, %v476
        %482 = vmatpush.bf16.msra.mxu0 0
        %483 = vmatpush.bf16.msra.mxu0 0
        %484 = vmatpush.bf16.msra.mxu0 0
        %485 = vmatpush.bf16.msra.mxu0 0
        %486 = vmatpush.bf16.msra.mxu0 0
        %487 = vmatpush.bf16.msra.mxu0 0
        %488 = vmatpush.bf16.msra.mxu0 %v479
        %489 = vmatpush.bf16.msra.mxu0 %v478
        %490 = vmatmul.bf16.gmra.mxu0 %v448
        %v491 = vpop.f32.mrf.mxu0
        %v492 = vadd.f32 0.0, %v491
        %v493 = vpop.f32.mrf.mxu0
        %494 = vdwg.mxu0
        %v495 = vpack.c.bf16 %v492, %v492
        %s496 = smul.addr %s427, 4
        %s497 = scalar_lea.vmem [#allocation7], %s496
        %v498 = vld [vmem:[%s497] sm:$0xf]
        %v499 = vld [vmem:[%s497 + $0x4] sm:$0xf]
        %v500 = vld [vmem:[%s497 + $0x8] sm:$0xf]
        %v501 = vld [vmem:[%s497 + $0xc] sm:$0xf]
        %v506 = vunpack.c.l.b16 %v498
        %v507 = vunpack.c.l.b16 %v499
        %v508 = vunpack.c.l.b16 %v500
        %v509 = vunpack.c.l.b16 %v501
        %v510 = vpack.c.b16 %v507, %v506
        %v511 = vpack.c.b16 %v509, %v508
        %514 = vmatpush.bf16.msra.mxu0 0
        %515 = vmatpush.bf16.msra.mxu0 0
        %516 = vmatpush.bf16.msra.mxu0 0
        %517 = vmatpush.bf16.msra.mxu0 0
        %518 = vmatpush.bf16.msra.mxu0 0
        %519 = vmatpush.bf16.msra.mxu0 0
        %520 = vmatpush.bf16.msra.mxu0 %v511
        %521 = vmatpush.bf16.msra.mxu0 %v510
        %522 = vmatmul.bf16.gmra.mxu0 %v448
        %v523 = vpop.f32.mrf.mxu0
        %v524 = vadd.f32 0.0, %v523
        %v525 = vpop.f32.mrf.mxu0
        %526 = vdwg.mxu0
        %v527 = vpack.c.bf16 %v524, %v524
        %vm528 = vcmask 27648
        %529 = vst.msk [vmem:[%s397] sm:$0xf] %vm528, %v463
        %530 = vst.msk [vmem:[%s410] sm:$0xf] %vm528, %v495
        %531 = vst.msk [vmem:[%s423] sm:$0xf] %vm528, %v527
        %533 = vrot.lane.b32.xlu0 %v463, 124
        %v534 = vpop.permute.xlu0 %533
        %s536 = scalar_lea.vmem %s397, 4
        %537 = vst.msk [vmem:[%s536] sm:$0xf] %vm528, %v534
        %539 = vrot.lane.b32.xlu0 %v495, 124
        %v540 = vpop.permute.xlu0 %539
        %s542 = scalar_lea.vmem %s410, 4
        %543 = vst.msk [vmem:[%s542] sm:$0xf] %vm528, %v540
        %545 = vrot.lane.b32.xlu0 %v527, 124
        %v546 = vpop.permute.xlu0 %545
        %s548 = scalar_lea.vmem %s423, 4
        %549 = vst.msk [vmem:[%s548] sm:$0xf] %vm528, %v546
        %550 = vrot.lane.b32.xlu0 %v463, 120
        %v551 = vpop.permute.xlu0 %550
        %s553 = scalar_lea.vmem %s397, 8
        %554 = vst.msk [vmem:[%s553] sm:$0xf] %vm528, %v551
        %555 = vrot.lane.b32.xlu0 %v495, 120
        %v556 = vpop.permute.xlu0 %555
        %s558 = scalar_lea.vmem %s410, 8
        %559 = vst.msk [vmem:[%s558] sm:$0xf] %vm528, %v556
        %560 = vrot.lane.b32.xlu0 %v527, 120
        %v561 = vpop.permute.xlu0 %560
        %s563 = scalar_lea.vmem %s423, 8
        %564 = vst.msk [vmem:[%s563] sm:$0xf] %vm528, %v561
        %565 = vrot.lane.b32.xlu0 %v463, 116
        %v566 = vpop.permute.xlu0 %565
        %s568 = scalar_lea.vmem %s397, 12
        %569 = vst.msk [vmem:[%s568] sm:$0xf] %vm528, %v566
        %570 = vrot.lane.b32.xlu0 %v495, 116
        %v571 = vpop.permute.xlu0 %570
        %s573 = scalar_lea.vmem %s410, 12
        %574 = vst.msk [vmem:[%s573] sm:$0xf] %vm528, %v571
        %575 = vrot.lane.b32.xlu0 %v527, 116
        %v576 = vpop.permute.xlu0 %575
        %s578 = scalar_lea.vmem %s423, 12
        %579 = vst.msk [vmem:[%s578] sm:$0xf] %vm528, %v576
        %580 = vrot.lane.b32.xlu0 %v463, 112
        %v581 = vpop.permute.xlu0 %580
        %s583 = scalar_lea.vmem %s397, 16
        %584 = vst.msk [vmem:[%s583] sm:$0xf] %vm528, %v581
        %585 = vrot.lane.b32.xlu0 %v495, 112
        %v586 = vpop.permute.xlu0 %585
        %s588 = scalar_lea.vmem %s410, 16
        %589 = vst.msk [vmem:[%s588] sm:$0xf] %vm528, %v586
        %590 = vrot.lane.b32.xlu0 %v527, 112
        %v591 = vpop.permute.xlu0 %590
        %s593 = scalar_lea.vmem %s423, 16
        %594 = vst.msk [vmem:[%s593] sm:$0xf] %vm528, %v591
        %595 = vrot.lane.b32.xlu0 %v463, 108
        %v596 = vpop.permute.xlu0 %595
        %s598 = scalar_lea.vmem %s397, 20
        %599 = vst.msk [vmem:[%s598] sm:$0xf] %vm528, %v596
        %600 = vrot.lane.b32.xlu0 %v495, 108
        %v601 = vpop.permute.xlu0 %600
        %s603 = scalar_lea.vmem %s410, 20
        %604 = vst.msk [vmem:[%s603] sm:$0xf] %vm528, %v601
        %605 = vrot.lane.b32.xlu0 %v527, 108
        %v606 = vpop.permute.xlu0 %605
        %s608 = scalar_lea.vmem %s423, 20
        %609 = vst.msk [vmem:[%s608] sm:$0xf] %vm528, %v606
        %610 = vrot.lane.b32.xlu0 %v463, 104
        %v611 = vpop.permute.xlu0 %610
        %s613 = scalar_lea.vmem %s397, 24
        %614 = vst.msk [vmem:[%s613] sm:$0xf] %vm528, %v611
        %615 = vrot.lane.b32.xlu0 %v495, 104
        %v616 = vpop.permute.xlu0 %615
        %s618 = scalar_lea.vmem %s410, 24
        %619 = vst.msk [vmem:[%s618] sm:$0xf] %vm528, %v616
        %620 = vrot.lane.b32.xlu0 %v527, 104
        %v621 = vpop.permute.xlu0 %620
        %s623 = scalar_lea.vmem %s423, 24
        %624 = vst.msk [vmem:[%s623] sm:$0xf] %vm528, %v621
        %625 = vrot.lane.b32.xlu0 %v463, 100
        %v626 = vpop.permute.xlu0 %625
        %s628 = scalar_lea.vmem %s397, 28
        %629 = vst.msk [vmem:[%s628] sm:$0xf] %vm528, %v626
        %630 = vrot.lane.b32.xlu0 %v495, 100
        %v631 = vpop.permute.xlu0 %630
        %s633 = scalar_lea.vmem %s410, 28
        %634 = vst.msk [vmem:[%s633] sm:$0xf] %vm528, %v631
        %635 = vrot.lane.b32.xlu0 %v527, 100
        %v636 = vpop.permute.xlu0 %635
        %s638 = scalar_lea.vmem %s423, 28
        %639 = vst.msk [vmem:[%s638] sm:$0xf] %vm528, %v636
        %s640 = smul.u32 8, %s30
        %p641 = scmp.lt.s32.totalorder %s28, 1
        %s642 = scalar_select %p641, %s28, 1
        %p643 = scmp.lt.s32.totalorder %s640, 7
        %s644 = scalar_select %p643, %s640, 7
        %p645 = scmp.lt.s32.totalorder %s29, 0
        %s646 = scalar_select %p645, %s29, 0
        %s647 = sadd.s32 %s646, %s644
        %s648 = smul.addr %s642, 8
        %s649 = sadd.s32 %s647, %s648
        %s650 = smul.addr %s649, 4
        %s651 = scalar_lea.vmem %s4, %s650
        %s652 = smul.u32 8, %s30
        %p653 = scmp.lt.s32.totalorder %s28, 1
        %s654 = scalar_select %p653, %s28, 1
        %p655 = scmp.lt.s32.totalorder %s652, 7
        %s656 = scalar_select %p655, %s652, 7
        %p657 = scmp.lt.s32.totalorder %s29, 0
        %s658 = scalar_select %p657, %s29, 0
        %s659 = sadd.s32 %s658, %s656
        %s660 = smul.addr %s654, 8
        %s661 = sadd.s32 %s659, %s660
        %s662 = smul.addr %s661, 4
        %s663 = scalar_lea.vmem %s5, %s662
        %s664 = smul.u32 8, %s30
        %p665 = scmp.lt.s32.totalorder %s28, 1
        %s666 = scalar_select %p665, %s28, 1
        %p667 = scmp.lt.s32.totalorder %s664, 7
        %s668 = scalar_select %p667, %s664, 7
        %p669 = scmp.lt.s32.totalorder %s29, 0
        %s670 = scalar_select %p669, %s29, 0
        %s671 = sadd.s32 %s670, %s668
        %s672 = smul.addr %s666, 8
        %s673 = sadd.s32 %s671, %s672
        %s674 = smul.addr %s673, 4
        %s675 = scalar_lea.vmem %s6, %s674
        // Predicated region
        $region53: #{tpu_custom_call.1} parent=35 // pred_check
          %p676 = pneg %p155
        $region54: #{tpu_custom_call.1} parent=35 // pred_check_branch
          %678 = sbr.rel (%p676) target = $region56
        $region55: #{tpu_custom_call.1} parent=35 // pred_region
          %s679 = smul.u32 8, %s30
        $region56: #{tpu_custom_call.1} parent=35 // pred_fallthru
          _
        // Predicated region
        $region57: #{tpu_custom_call.1} parent=35 // pred_check
          %p680 = pneg %p185
        $region58: #{tpu_custom_call.1} parent=35 // pred_check_branch
          %682 = sbr.rel (%p680) target = $region60
        $region59: #{tpu_custom_call.1} parent=35 // pred_region
          %s683 = smul.u32 8, %s30
        $region60: #{tpu_custom_call.1} parent=35 // pred_fallthru
          _
        // Predicated region
        $region61: #{tpu_custom_call.1} parent=35 // pred_check
          %p684 = pneg %p215
        $region62: #{tpu_custom_call.1} parent=35 // pred_check_branch
          %686 = sbr.rel (%p684) target = $region64
        $region63: #{tpu_custom_call.1} parent=35 // pred_region
          %s687 = smul.u32 8, %s30
        $region64: #{tpu_custom_call.1} parent=35 // pred_fallthru
          _
      $region36: #{tpu_custom_call.1} parent=5 // pred_fallthru
        _
      %p688 = scmp.le.s32.totalorder 2, %s18
      // Predicated region
      $region65: #{tpu_custom_call.1} parent=5 // pred_check
        %p689 = pneg %p688
      $region66: #{tpu_custom_call.1} parent=5 // pred_check_branch
        %691 = sbr.rel (%p689) target = $region68
      $region67: #{tpu_custom_call.1} parent=5 // pred_region
        %s692 = ssub.s32 %s18, 2
        // Predicated region
        $region69: #{tpu_custom_call.1} parent=67 // pred_check
          %p693 = pneg %p161
        $region70: #{tpu_custom_call.1} parent=67 // pred_check_branch
          %695 = sbr.rel (%p693) target = $region72
        $region71: #{tpu_custom_call.1} parent=67 // pred_region
          %s696 = smul.u32 8, %s33
          %p697 = scmp.lt.s32.totalorder %s31, 1
          %s698 = scalar_select %p697, %s31, 1
          %p699 = scmp.lt.s32.totalorder %s696, 7
          %s700 = scalar_select %p699, %s696, 7
          %p701 = scmp.lt.s32.totalorder %s32, 0
          %s702 = scalar_select %p701, %s32, 0
          %s703 = sadd.s32 %s702, %s700
          %s704 = smul.addr %s698, 8
          %s705 = sadd.s32 %s703, %s704
          %s706 = smul.addr %s705, 4
          %s707 = scalar_lea.vmem %s4, %s706
        $region72: #{tpu_custom_call.1} parent=67 // pred_fallthru
          _
        // Predicated region
        $region73: #{tpu_custom_call.1} parent=67 // pred_check
          %p708 = pneg %p191
        $region74: #{tpu_custom_call.1} parent=67 // pred_check_branch
          %710 = sbr.rel (%p708) target = $region76
        $region75: #{tpu_custom_call.1} parent=67 // pred_region
          %s711 = smul.u32 8, %s33
          %p712 = scmp.lt.s32.totalorder %s31, 1
          %s713 = scalar_select %p712, %s31, 1
          %p714 = scmp.lt.s32.totalorder %s711, 7
          %s715 = scalar_select %p714, %s711, 7
          %p716 = scmp.lt.s32.totalorder %s32, 0
          %s717 = scalar_select %p716, %s32, 0
          %s718 = sadd.s32 %s717, %s715
          %s719 = smul.addr %s713, 8
          %s720 = sadd.s32 %s718, %s719
          %s721 = smul.addr %s720, 4
          %s722 = scalar_lea.vmem %s5, %s721
        $region76: #{tpu_custom_call.1} parent=67 // pred_fallthru
          _
        // Predicated region
        $region77: #{tpu_custom_call.1} parent=67 // pred_check
          %p723 = pneg %p221
        $region78: #{tpu_custom_call.1} parent=67 // pred_check_branch
          %725 = sbr.rel (%p723) target = $region80
        $region79: #{tpu_custom_call.1} parent=67 // pred_region
          %s726 = smul.u32 8, %s33
          %p727 = scmp.lt.s32.totalorder %s31, 1
          %s728 = scalar_select %p727, %s31, 1
          %p729 = scmp.lt.s32.totalorder %s726, 7
          %s730 = scalar_select %p729, %s726, 7
          %p731 = scmp.lt.s32.totalorder %s32, 0
          %s732 = scalar_select %p731, %s32, 0
          %s733 = sadd.s32 %s732, %s730
          %s734 = smul.addr %s728, 8
          %s735 = sadd.s32 %s733, %s734
          %s736 = smul.addr %s735, 4
          %s737 = scalar_lea.vmem %s6, %s736
        $region80: #{tpu_custom_call.1} parent=67 // pred_fallthru
          _
      $region68: #{tpu_custom_call.1} parent=5 // pred_fallthru
        _
    $region6: #{tpu_custom_call.1} parent=1 // loop_footer
      %s22 = sadd.s32 1, %s18
    $region7: #{tpu_custom_call.1} parent=1 // loop_footer_branch
      %17 = sbr.rel target = $region3
    $region8: #{tpu_custom_call.1} parent=1 // loop_exit
      _
    %738 = vsyncpa [#allocation3], 1
    %s739 = scalar_lea.sflag [#allocation3], 1
    %740 = vsyncpa %s739, 1
    %741 = vsyncpa [#allocation5], 1
    %742 = vsyncpa [#allocation8], 1

</llo_original>
